<compile_context>
chip_gen: v7x
topology: tpu7x:2x2x1
jax: 0.10.0
libtpu: 0.0.40
codegen_flags: <defaults>
</compile_context>

<pallas_src>
import functools

import jax
import jax.numpy as jnp
from jax.experimental import pallas as pl
from jax.experimental.pallas import tpu as pltpu


def _round_up(x, m):
    return ((x + m - 1) // m) * m


def _chunk_size(tile_c, max_chunk):
    """Largest multiple of 128 that divides tile_c and is <= max_chunk."""
    best = 128
    d = 128
    while d <= min(tile_c, max_chunk):
        if tile_c % d == 0:
            best = d
        d += 128
    return best


def _ce_kernel(logits_ref, targets_ref, nll_ref, m_ref, s_ref, t_ref, *,
               tile_c, chunk_c):
    """One (TILE_N, TILE_C) block of the streaming cross-entropy.

    Running max / exp-sum / target-logit live in (TILE_N, 1) VMEM scratch; the
    class axis is the last grid axis ("arbitrary"), so the state streams across
    class blocks and VMEM stays bounded for any vocabulary size.
    """
    j = pl.program_id(1)                 # class-block index (reduction axis, last)
    tile_n = logits_ref.shape[0]
    n_chunks = tile_c // chunk_c

    @pl.when(j == 0)
    def _():
        m_ref[...] = jnp.full_like(m_ref, -jnp.inf)
        s_ref[...] = jnp.zeros_like(s_ref)
        t_ref[...] = jnp.zeros_like(t_ref)

    # Target index relative to the start of this class block: a (TILE_N, 1) op
    # instead of adding j*tile_c to a full-tile iota.
    tgt_local = targets_ref[...] - j * tile_c                      # (TILE_N, 1) int32
    # Loop-invariant chunk-local lane iota, hoisted out of the chunk loop.
    lane_iota = jax.lax.broadcasted_iota(jnp.int32, (tile_n, chunk_c), 1)

    def chunk_body(k, carry):
        start = pl.multiple_of(k * chunk_c, 128)
        # Upcast only a (TILE_N, chunk_c) sub-chunk -> the f32 temp stays small;
        # never a full (TILE_N, TILE_C) f32 slab spilled to VMEM.
        x = logits_ref[:, pl.ds(start, chunk_c)].astype(jnp.float32)

        # Online (streaming) logsumexp over the class axis.
        m_prev = m_ref[...]
        m_new = jnp.maximum(m_prev, jnp.max(x, axis=-1, keepdims=True))
        s_ref[...] = (s_ref[...] * jnp.exp(m_prev - m_new)
                      + jnp.sum(jnp.exp(x - m_new), axis=-1, keepdims=True))
        m_ref[...] = m_new

        # Pick the target-class logit for this chunk (matches in exactly one
        # chunk of exactly one class block).
        t_ref[...] += jnp.sum(
            jnp.where(lane_iota == (tgt_local - k * chunk_c), x, 0.0),
            axis=-1, keepdims=True)
        return carry

    jax.lax.fori_loop(0, n_chunks, chunk_body, 0, unroll=True)

    # Finalize per-sample NLL on the last class block.
    @pl.when(j == pl.num_programs(1) - 1)
    def _():
        nll_ref[...] = m_ref[...] + jnp.log(s_ref[...]) - t_ref[...]


def classification_loss(logits, targets, average=True, *,
                        max_tile_n=256, max_tile_c=4096, max_chunk_c=512):
    """Equivalent of ClassificationLoss.forward(output, y_target).

    logits:  (N, C) float array (f32 or bf16 — streamed as-is, upcast in-kernel)
    targets: (N,)   int   array of class indices in [0, C)
    returns: scalar float32 loss (mean over N if average=True, else sum)
    """
    assert max_tile_c % 128 == 0, "max_tile_c must be a multiple of 128"
    assert max_chunk_c % 128 == 0, "max_chunk_c must be a multiple of 128"
    if not jnp.issubdtype(logits.dtype, jnp.floating):
        logits = logits.astype(jnp.float32)

    n, c = logits.shape
    itemsize = jnp.dtype(logits.dtype).itemsize
    sublane = max(8, 32 // itemsize)               # 8 for f32, 16 for bf16

    # Batch tiling (sublane axis). Prefer >= 2 row blocks when N allows it so the
    # "parallel" batch axis can shard across both TensorCores on multi-TC chips.
    tile_n = min(max_tile_n, _round_up(n, sublane))
    if n > sublane:
        tile_n = min(tile_n, _round_up((n + 1) // 2, sublane))
    n_pad = _round_up(n, tile_n)

    # Class tiling (lane axis): 128-aligned; full C in one block when it fits.
    c_128 = _round_up(c, 128)
    if c_128 <= max_tile_c:
        tile_c, c_pad = c_128, c_128
    else:
        tile_c, c_pad = max_tile_c, _round_up(c, max_tile_c)
    chunk_c = _chunk_size(tile_c, max_chunk_c)

    # Pad classes with a large-negative value so padded classes never contribute
    # to the logsumexp.  NOTE: padded *rows* produce garbage NLL values that are
    # only safe because we slice nll[:n] before reducing — never sum the full
    # padded buffer.
    pad_val = float(jnp.finfo(logits.dtype).min)
    logits_p = logits
    if (n_pad, c_pad) != (n, c):
        logits_p = jnp.pad(logits, ((0, n_pad - n), (0, c_pad - c)),
                           constant_values=pad_val)
    targets_p = jnp.pad(targets.astype(jnp.int32), (0, n_pad - n)).reshape(n_pad, 1)

    grid = (n_pad // tile_n, c_pad // tile_c)
    kernel = functools.partial(_ce_kernel, tile_c=tile_c, chunk_c=chunk_c)

    nll = pl.pallas_call(
        kernel,
        out_shape=jax.ShapeDtypeStruct((n_pad, 1), jnp.float32),
        grid_spec=pltpu.PrefetchScalarGridSpec(
            num_scalar_prefetch=0,
            grid=grid,
            in_specs=[
                pl.BlockSpec((tile_n, tile_c), lambda i, j: (i, j)),   # logits
                pl.BlockSpec((tile_n, 1), lambda i, j: (i, 0)),        # targets
            ],
            out_specs=pl.BlockSpec((tile_n, 1), lambda i, j: (i, 0)),  # per-sample NLL
            scratch_shapes=[
                pltpu.VMEM((tile_n, 1), jnp.float32),   # running max
                pltpu.VMEM((tile_n, 1), jnp.float32),   # running exp-sum
                pltpu.VMEM((tile_n, 1), jnp.float32),   # target logit
            ],
        ),
        compiler_params=pltpu.CompilerParams(
            dimension_semantics=("parallel", "arbitrary"),
            vmem_limit_bytes=48 * 1024 * 1024,
        ),
        cost_estimate=pl.CostEstimate(
            flops=5 * n_pad * c_pad,
            transcendentals=n_pad * c_pad,
            bytes_accessed=n_pad * c_pad * itemsize + 2 * n_pad * 4,
        ),
    )(logits_p, targets_p)

    total = jnp.sum(nll[:n, 0])
    if average:
        total = total / jnp.float32(n)
    return total


if __name__ == "__main__":
    key = jax.random.PRNGKey(0)
    k1, k2, k3, k4 = jax.random.split(key, 4)

    # Test 1: small classification shapes (batch=8, classes=32), f32, single block.
    N, C = 8, 32
    logits = jax.random.normal(k1, (N, C), dtype=jnp.float32)
    targets = jax.random.randint(k2, (N,), 0, C, dtype=jnp.int32)
    loss = classification_loss(logits, targets, average=True)
    jax.block_until_ready(loss)
    ref = -jnp.mean(jax.nn.log_softmax(logits, axis=-1)[jnp.arange(N), targets])
    assert jnp.allclose(loss, ref, atol=1e-5, rtol=1e-5), (loss, ref)

    # Test 2: non-multiple-of-8 batch, single class block with a multi-chunk inner
    # loop (tile_c=384, chunk_c=128), and >=2 row blocks (megacore path).
    N2, C2 = 20, 384
    logits2 = jax.random.normal(k3, (N2, C2), dtype=jnp.float32)
    targets2 = jax.random.randint(k4, (N2,), 0, C2, dtype=jnp.int32)
    loss2 = classification_loss(logits2, targets2, average=True, max_chunk_c=128)
    jax.block_until_ready(loss2)
    ref2 = -jnp.mean(jax.nn.log_softmax(logits2, axis=-1)[jnp.arange(N2), targets2])
    assert jnp.allclose(loss2, ref2, atol=1e-5, rtol=1e-5), (loss2, ref2)

    # Test 3: multi-class-block streaming-logsumexp path (tile_c=128, 3 class blocks).
    loss2b = classification_loss(logits2, targets2, average=True, max_tile_c=128)
    jax.block_until_ready(loss2b)
    assert jnp.allclose(loss2b, ref2, atol=1e-5, rtol=1e-5), (loss2b, ref2)

    # Test 4: bf16 logits streamed as bf16 (half HBM bytes), f32 math in-kernel,
    # sum reduction.
    logits3 = logits2.astype(jnp.bfloat16)
    loss3 = classification_loss(logits3, targets2, average=False)
    jax.block_until_ready(loss3)
    ref3 = -jnp.sum(jax.nn.log_softmax(logits3.astype(jnp.float32),
                                       axis=-1)[jnp.arange(N2), targets2])
    assert jnp.allclose(loss3, ref3, atol=1e-4, rtol=1e-4), (loss3, ref3)

    print("KERNEL_OK")
</pallas_src>

<mosaic_0001>
module attributes {stable_mosaic.version = 11 : i64} {
  func.func @_ce_kernel(%arg0: i32, %arg1: i32, %arg2: memref<8x128xf32, #tpu.memory_space<vmem>>, %arg3: memref<8x1xi32, #tpu.memory_space<vmem>>, %arg4: memref<8x1xf32, #tpu.memory_space<vmem>>, %arg5: memref<8x1xf32, #tpu.memory_space<vmem>>, %arg6: memref<8x1xf32, #tpu.memory_space<vmem>>, %arg7: memref<8x1xf32, #tpu.memory_space<vmem>>) attributes {dimension_semantics = [#tpu.dimension_semantics<parallel>, #tpu.dimension_semantics<arbitrary>], iteration_bounds = array<i64: 1, 1>, scalar_prefetch = 0 : i64, scratch_operands = 3 : i64, tpu.core_type = #tpu.core_type<tc>, window_params = [{transform_indices = @transform_0, window_bounds = array<i64: 8, 128>}, {transform_indices = @transform_1, window_bounds = array<i64: 8, 1>}, {transform_indices = @transform_2, window_bounds = array<i64: 8, 1>}]} {
    %c0_i32 = arith.constant 0 : i32
    %0 = arith.cmpi eq, %arg1, %c0_i32 : i32
    %1 = arith.extui %0 : i1 to i32
    %c0_i32_0 = arith.constant 0 : i32
    %2 = arith.cmpi ne, %1, %c0_i32_0 : i32
    scf.if %2 {
      %cst_23 = arith.constant 0xFF800000 : f32
      %43 = vector.broadcast %cst_23 : f32 to vector<8x1xf32>
      %c0_24 = arith.constant 0 : index
      %c0_25 = arith.constant 0 : index
      %44 = vector.load %arg5[%c0_24, %c0_25] : memref<8x1xf32, #tpu.memory_space<vmem>>, vector<8x1xf32>
      tpu.vector_store %arg5[%c0_24, %c0_25], %43 {strides = array<i32>} : memref<8x1xf32, #tpu.memory_space<vmem>>, vector<8x1xf32>,
      %cst_26 = arith.constant 0.000000e+00 : f32
      %45 = vector.broadcast %cst_26 : f32 to vector<8x1xf32>
      %c0_27 = arith.constant 0 : index
      %c0_28 = arith.constant 0 : index
      %46 = vector.load %arg6[%c0_27, %c0_28] : memref<8x1xf32, #tpu.memory_space<vmem>>, vector<8x1xf32>
      tpu.vector_store %arg6[%c0_27, %c0_28], %45 {strides = array<i32>} : memref<8x1xf32, #tpu.memory_space<vmem>>, vector<8x1xf32>,
      %cst_29 = arith.constant 0.000000e+00 : f32
      %47 = vector.broadcast %cst_29 : f32 to vector<8x1xf32>
      %c0_30 = arith.constant 0 : index
      %c0_31 = arith.constant 0 : index
      %48 = vector.load %arg7[%c0_30, %c0_31] : memref<8x1xf32, #tpu.memory_space<vmem>>, vector<8x1xf32>
      tpu.vector_store %arg7[%c0_30, %c0_31], %47 {strides = array<i32>} : memref<8x1xf32, #tpu.memory_space<vmem>>, vector<8x1xf32>,
    } else {
    }
    %c0 = arith.constant 0 : index
    %c0_1 = arith.constant 0 : index
    %3 = vector.load %arg3[%c0, %c0_1] : memref<8x1xi32, #tpu.memory_space<vmem>>, vector<8x1xi32>
    %c128_i32 = arith.constant 128 : i32
    %4 = arith.muli %arg1, %c128_i32 : i32
    %5 = vector.broadcast %4 : i32 to vector<8x1xi32>
    %6 = arith.subi %3, %5 : vector<8x1xi32>
    %7 = tpu.iota {dimensions = array<i32: 1>} : vector<8x128xi32>
    %c0_i32_2 = arith.constant 0 : i32
    %c128_i32_3 = arith.constant 128 : i32
    %8 = arith.muli %c0_i32_2, %c128_i32_3 : i32
    %9 = tpu.assume_multiple %8, 128 : i32
    %c0_4 = arith.constant 0 : index
    %10 = arith.index_cast %9 : i32 to index
    %11 = vector.load %arg2[%c0_4, %10] : memref<8x128xf32, #tpu.memory_space<vmem>>, vector<8x128xf32>
    %c0_5 = arith.constant 0 : index
    %c0_6 = arith.constant 0 : index
    %12 = vector.load %arg5[%c0_5, %c0_6] : memref<8x1xf32, #tpu.memory_space<vmem>>, vector<8x1xf32>
    %cst = arith.constant dense<0xFF800000> : vector<8xf32>
    %13 = vector.multi_reduction <maximumf>, %11, %cst [1] : vector<8x128xf32> to vector<8xf32>
    %14 = vector.shape_cast %13 : vector<8xf32> to vector<8x1xf32>
    %15 = arith.maximumf %12, %14 : vector<8x1xf32>
    %c0_7 = arith.constant 0 : index
    %c0_8 = arith.constant 0 : index
    %16 = vector.load %arg6[%c0_7, %c0_8] : memref<8x1xf32, #tpu.memory_space<vmem>>, vector<8x1xf32>
    %17 = arith.subf %12, %15 : vector<8x1xf32>
    %18 = math.exp %17 : vector<8x1xf32>
    %19 = arith.mulf %16, %18 : vector<8x1xf32>
    %20 = vector.broadcast %15 : vector<8x1xf32> to vector<8x128xf32>
    %21 = arith.subf %11, %20 : vector<8x128xf32>
    %22 = math.exp %21 : vector<8x128xf32>
    %cst_9 = arith.constant dense<0.000000e+00> : vector<8xf32>
    %23 = vector.multi_reduction <add>, %22, %cst_9 [1] : vector<8x128xf32> to vector<8xf32>
    %24 = vector.shape_cast %23 : vector<8xf32> to vector<8x1xf32>
    %25 = arith.addf %19, %24 : vector<8x1xf32>
    %c0_10 = arith.constant 0 : index
    %c0_11 = arith.constant 0 : index
    %26 = vector.load %arg6[%c0_10, %c0_11] : memref<8x1xf32, #tpu.memory_space<vmem>>, vector<8x1xf32>
    tpu.vector_store %arg6[%c0_10, %c0_11], %25 {strides = array<i32>} : memref<8x1xf32, #tpu.memory_space<vmem>>, vector<8x1xf32>,
    %c0_12 = arith.constant 0 : index
    %c0_13 = arith.constant 0 : index
    %27 = vector.load %arg5[%c0_12, %c0_13] : memref<8x1xf32, #tpu.memory_space<vmem>>, vector<8x1xf32>
    tpu.vector_store %arg5[%c0_12, %c0_13], %15 {strides = array<i32>} : memref<8x1xf32, #tpu.memory_space<vmem>>, vector<8x1xf32>,
    %c0_14 = arith.constant 0 : index
    %c0_15 = arith.constant 0 : index
    %28 = vector.load %arg7[%c0_14, %c0_15] : memref<8x1xf32, #tpu.memory_space<vmem>>, vector<8x1xf32>
    %c128_i32_16 = arith.constant 128 : i32
    %29 = arith.muli %c0_i32_2, %c128_i32_16 : i32
    %30 = vector.broadcast %29 : i32 to vector<8x1xi32>
    %31 = arith.subi %6, %30 : vector<8x1xi32>
    %32 = vector.broadcast %31 : vector<8x1xi32> to vector<8x128xi32>
    %33 = arith.cmpi eq, %7, %32 : vector<8x128xi32>
    %cst_17 = arith.constant 0.000000e+00 : f32
    %34 = vector.broadcast %cst_17 : f32 to vector<8x128xf32>
    %35 = arith.select %33, %11, %34 : vector<8x128xi1>, vector<8x128xf32>
    %cst_18 = arith.constant dense<0.000000e+00> : vector<8xf32>
    %36 = vector.multi_reduction <add>, %35, %cst_18 [1] : vector<8x128xf32> to vector<8xf32>
    %37 = vector.shape_cast %36 : vector<8xf32> to vector<8x1xf32>
    %38 = arith.addf %28, %37 : vector<8x1xf32>
    %c0_19 = arith.constant 0 : index
    %c0_20 = arith.constant 0 : index
    %39 = vector.load %arg7[%c0_19, %c0_20] : memref<8x1xf32, #tpu.memory_space<vmem>>, vector<8x1xf32>
    tpu.vector_store %arg7[%c0_19, %c0_20], %38 {strides = array<i32>} : memref<8x1xf32, #tpu.memory_space<vmem>>, vector<8x1xf32>,
    %c1_i32 = arith.constant 1 : i32
    %c0_i32_21 = arith.constant 0 : i32
    %40 = arith.cmpi eq, %arg1, %c0_i32_21 : i32
    %41 = arith.extui %40 : i1 to i32
    %c0_i32_22 = arith.constant 0 : i32
    %42 = arith.cmpi ne, %41, %c0_i32_22 : i32
    scf.if %42 {
      %c0_23 = arith.constant 0 : index
      %c0_24 = arith.constant 0 : index
      %43 = vector.load %arg5[%c0_23, %c0_24] : memref<8x1xf32, #tpu.memory_space<vmem>>, vector<8x1xf32>
      %c0_25 = arith.constant 0 : index
      %c0_26 = arith.constant 0 : index
      %44 = vector.load %arg6[%c0_25, %c0_26] : memref<8x1xf32, #tpu.memory_space<vmem>>, vector<8x1xf32>
      %45 = math.log %44 : vector<8x1xf32>
      %46 = arith.addf %43, %45 : vector<8x1xf32>
      %c0_27 = arith.constant 0 : index
      %c0_28 = arith.constant 0 : index
      %47 = vector.load %arg7[%c0_27, %c0_28] : memref<8x1xf32, #tpu.memory_space<vmem>>, vector<8x1xf32>
      %48 = arith.subf %46, %47 : vector<8x1xf32>
      %c0_29 = arith.constant 0 : index
      %c0_30 = arith.constant 0 : index
      %49 = vector.load %arg4[%c0_29, %c0_30] : memref<8x1xf32, #tpu.memory_space<vmem>>, vector<8x1xf32>
      tpu.vector_store %arg4[%c0_29, %c0_30], %48 {strides = array<i32>} : memref<8x1xf32, #tpu.memory_space<vmem>>, vector<8x1xf32>,
    } else {
    }
    return
  }
  func.func @transform_0(%arg0: i32, %arg1: i32) -> (i32, i32) {
    %c0_i32 = arith.constant 0 : i32
    return %arg0, %arg1 : i32, i32
  }
  func.func @transform_1(%arg0: i32, %arg1: i32) -> (i32, i32) {
    %c0_i32 = arith.constant 0 : i32
    %c0_i32_0 = arith.constant 0 : i32
    return %arg0, %c0_i32 : i32, i32
  }
  func.func @transform_2(%arg0: i32, %arg1: i32) -> (i32, i32) {
    %c0_i32 = arith.constant 0 : i32
    %c0_i32_0 = arith.constant 0 : i32
    return %arg0, %c0_i32 : i32, i32
  }
}

</mosaic_0001>

<llo_original>
// kernel: tpu_custom_call.1
$region0: #{tpu_custom_call.1}
  #allocation0 [shape = 'u32[]', space=smem, size = 0x4, offset = 0x4, fixed_abs, tag = 'smem constant byte address 0x4 - core index']
  #allocation1 [shape = 'u32[144,128]{1,0:T(1,128)}', space=vmem, size = 0x12000, scoped, tag = 'internal scratch']
  #allocation2 [shape = 'f32[8,1]{1,0:T(8,128)}', space=vmem, size = 0x1000, scoped, tag = 'scratch operand']
  #allocation3 [shape = 'f32[8,1]{1,0:T(8,128)}', space=vmem, size = 0x1000, scoped, tag = 'scratch operand']
  #allocation4 [shape = 'f32[8,1]{1,0:T(8,128)}', space=vmem, size = 0x1000, scoped, tag = 'scratch operand']
  %s0 = inlined_call_operand.vmem [shape: f32[8,128], index: 0, kind: input, shape index: {}]
  %s1 = inlined_call_operand.vmem [shape: s32[8,1], index: 1, kind: input, shape index: {}]
  %s2 = inlined_call_operand.vmem [shape: f32[8,1], index: 2, kind: output, shape index: {}]
  %s3 = sld [smem:[#allocation0]]
  $region26: #{tpu_custom_call.1} parent=0
    _
  %s5 = ssub.s32 1, %s3
  %s6 = scalar_select 0, %s5, %s3
  // Predicated region
  $region2: #{tpu_custom_call.1} parent=0 // pred_check
    _
  $region3: #{tpu_custom_call.1} parent=0 // pred_check_branch
    %8 = sbr.rel (0) target = $region5
  $region4: #{tpu_custom_call.1} parent=0 // pred_region
    _
  $region5: #{tpu_custom_call.1} parent=0 // pred_fallthru
    _
  // Predicated region
  $region6: #{tpu_custom_call.1} parent=0 // pred_check
    _
  $region7: #{tpu_custom_call.1} parent=0 // pred_check_branch
    %10 = sbr.rel (0) target = $region9
  $region8: #{tpu_custom_call.1} parent=0 // pred_region
    _
  $region9: #{tpu_custom_call.1} parent=0 // pred_fallthru
    _
  %p11 = scmp.eq.s32.totalorder 0, 0
  // Predicated region
  $region10: #{tpu_custom_call.1} parent=0 // pred_check
    %p12 = pneg %p11
  $region11: #{tpu_custom_call.1} parent=0 // pred_check_branch
    %14 = sbr.rel (%p12) target = $region13
  $region12: #{tpu_custom_call.1} parent=0 // pred_region
    %vm15 = vcmask 7168
    %16 = vst.msk [vmem:[#allocation2] sm:$0xff] %vm15, -inf
    %17 = vst.msk [vmem:[#allocation3] sm:$0xff] %vm15, 0.0
    %18 = vst.msk [vmem:[#allocation4] sm:$0xff] %vm15, 0.0
  $region13: #{tpu_custom_call.1} parent=0 // pred_fallthru
    _
  %v19 = vld [vmem:[%s1] sm:$0xff]
  %s20 = smul.u32 0, 128
  %v21 = vstv %s20
  %v22 = vsub.s32 %v19, %v21
  %v23 = vlaneseq
  %v24 = vand.u32 %v23, 127
  %v25 = vld [vmem:[%s0] sm:$0xff]
  %v26 = vld [vmem:[#allocation2] sm:$0xff]
  %27 = vmax.xlane.f32.xlu0 %v25
  %v28 = vpop.xlane.xlu0 %27
  %v29 = vmax.f32 %v26, %v28
  %v30 = vld [vmem:[#allocation3] sm:$0xff]
  %v31 = vsub.f32 %v26, %v29
  %v32 = vmul.f32 %v31, 1.442695
  %v33 = vpow.pop %v32
  %v34 = vmul.f32 %v30, %v33
  %36 = vset.pattern.permute.xlu0 0
  %37 = vperm.xlu0 %36, %v29
  %v38 = vpop.permute.xlu0 %37
  %v40 = vsub.f32 %v25, %v38
  %v41 = vmul.f32 %v40, 1.442695
  %v42 = vpow.pop %v41
  %43 = vadd.xlane.f32.xlu0 %v42
  %v44 = vpop.xlane.xlu0 %43
  %v45 = vadd.f32 %v34, %v44
  %vm46 = vcmask 7168
  %47 = vst.msk [vmem:[#allocation3] sm:$0xff] %vm46, %v45
  %48 = vst.msk [vmem:[#allocation2] sm:$0xff] %vm46, %v29
  %v49 = vld [vmem:[#allocation4] sm:$0xff]
  %50 = vset.pattern.permute.xlu0 0
  %51 = vperm.xlu0 %50, %v22
  %v52 = vpop.permute.xlu0 %51
  %vm53 = vcmp.eq.s32.totalorder %v24, %v52
  %v54 = vsel %vm53, %v25, 0.0
  %55 = vadd.xlane.f32.xlu0 %v54
  %v56 = vpop.xlane.xlu0 %55
  %v57 = vadd.f32 %v49, %v56
  %58 = vst.msk [vmem:[#allocation4] sm:$0xff] %vm46, %v57
  // Predicated region
  $region14: #{tpu_custom_call.1} parent=0 // pred_check
    %p59 = pneg %p11
  $region15: #{tpu_custom_call.1} parent=0 // pred_check_branch
    %61 = sbr.rel (%p59) target = $region17
  $region16: #{tpu_custom_call.1} parent=0 // pred_region
    %v62 = vld [vmem:[#allocation2] sm:$0xff]
    %v63 = vld [vmem:[#allocation3] sm:$0xff]
    %v64 = vlog2.pop %v63
    %v65 = vmul.f32 %v64, 0.6931472
    %v66 = vadd.f32 %v62, %v65
    %v67 = vld [vmem:[#allocation4] sm:$0xff]
    %v68 = vsub.f32 %v66, %v67
    %69 = vst.msk [vmem:[%s2] sm:$0xff] %vm46, %v68
  $region17: #{tpu_custom_call.1} parent=0 // pred_fallthru
    _
  // Predicated region
  $region18: #{tpu_custom_call.1} parent=0 // pred_check
    _
  $region19: #{tpu_custom_call.1} parent=0 // pred_check_branch
    %71 = sbr.rel (0) target = $region21
  $region20: #{tpu_custom_call.1} parent=0 // pred_region
    _
  $region21: #{tpu_custom_call.1} parent=0 // pred_fallthru
    _
  // Predicated region
  $region22: #{tpu_custom_call.1} parent=0 // pred_check
    _
  $region23: #{tpu_custom_call.1} parent=0 // pred_check_branch
    %73 = sbr.rel (0) target = $region25
  $region24: #{tpu_custom_call.1} parent=0 // pred_region
    _
  $region25: #{tpu_custom_call.1} parent=0 // pred_fallthru
    _

</llo_original>
